<compile_context>
chip_gen: v6e
topology: v6e:2x2x1
jax: 0.10.0
libtpu: 0.0.40
codegen_flags: <defaults>
</compile_context>

<pallas_src>
import functools

import jax
import jax.numpy as jnp
from jax.experimental import pallas as pl
from jax.experimental.pallas import tpu as pltpu

NEG_SLOPE = 0.2     # GATv2Conv default leaky_relu negative_slope
NEG_BIG = -1e30
LR_A = (1.0 + NEG_SLOPE) * 0.5   # leaky_relu(v) = LR_A*v + LR_B*|v|
LR_B = (1.0 - NEG_SLOPE) * 0.5


def _elu(v):
    # elu(v) = v if v > 0 else exp(v) - 1   (clamp exp arg in the dead branch)
    return jnp.where(v > 0, v, jnp.exp(jnp.minimum(v, 0.0)) - 1.0)


def _sigmoid(y):
    # numerically stable sigmoid; reciprocal runs on the EUP slot
    z = jnp.exp(-jnp.abs(y))
    r = pl.reciprocal(1.0 + z, approx=True)
    return jnp.clip(jnp.where(y >= 0, r, z * r), 0.0, 1.0)


def _bf16(v):
    return v.astype(jnp.bfloat16)


def _full_spec(shape):
    zeros = (0,) * len(shape)
    return pl.BlockSpec(shape, lambda i: zeros)


def _choose_tile(n):
    if n <= 256:
        return n                       # whole problem in one tile (toy / small graphs)
    for t in (256, 128, 64, 32, 16, 8):
        if n % t == 0:
            return t
    return n


# ----------------------------------------------------------------------------
# GATv2 attention body (shared by the plain and the final-fused kernel).
#   score(i,j,h) = att[h] . leaky_relu(x_r[i,h] + x_l[j,h]);  softmax over incoming edges;
#   act_h       = elu(alpha @ x_l[:,h] + bias_h)
# Scores are accumulated channel-by-channel on [TILE_I, N] tiles (source nodes on lanes),
# using the exact decomposition leaky_relu(v) = LR_A*v + LR_B*|v|.
# ----------------------------------------------------------------------------
def _gat_heads(att_ref, x_tile_ref, x_full_ref, xT_ref, adj_ref,
               wl_ref, bl_ref, wlT_ref, blT_ref, wr_ref, br_ref, bias_ref,
               *, heads, out_ch):
    f32 = jnp.float32
    # Linear transforms on the MXU (bf16 operands, f32 accumulation).
    xl = jnp.dot(_bf16(x_full_ref[...]), _bf16(wl_ref[...]),
                 preferred_element_type=f32) + bl_ref[...]            # [N, H*C]  (source feats)
    xlT = jnp.dot(_bf16(wlT_ref[...]), _bf16(xT_ref[...]),
                  preferred_element_type=f32) + blT_ref[...]          # [H*C, N]  (lane-major)
    xr = jnp.dot(_bf16(x_tile_ref[...]), _bf16(wr_ref[...]),
                 preferred_element_type=f32) + br_ref[...]            # [TI, H*C] (target feats)
    xl_bf = _bf16(xl)                                                 # cast once, slice per head

    mask = adj_ref[...] > 0                                           # [TI, N], computed once
    ti = adj_ref.shape[0]
    n = adj_ref.shape[1]

    acts = []
    for h in range(heads):
        sl = slice(h * out_ch, (h + 1) * out_ch)
        # rank-1 linear part of the leaky_relu decomposition (cheap [TI,1] / [1,N] vectors)
        sxr = jnp.zeros((ti, 1), f32)
        sxl = jnp.zeros((1, n), f32)
        for c in range(out_ch):
            row = h * out_ch + c
            a = att_ref[row]                                          # scalar from SMEM
            sxr = sxr + a * xr[:, row:row + 1]
            sxl = sxl + a * xlT[row:row + 1, :]
        # abs part: 3 VPU ops per channel on the [TI, N] tile (add, abs, fma)
        s_abs = jnp.zeros((ti, n), f32)
        for c in range(out_ch):
            row = h * out_ch + c
            e = xr[:, row:row + 1] + xlT[row:row + 1, :]              # [TI, N]
            s_abs = s_abs + att_ref[row] * jnp.abs(e)
        s = LR_A * (sxr + sxl) + LR_B * s_abs                         # == att . leaky_relu(.)

        s = jnp.where(mask, s, NEG_BIG)
        m = jnp.max(s, axis=1, keepdims=True)
        p = jnp.where(mask, jnp.exp(s - m), 0.0)
        denom = jnp.maximum(jnp.sum(p, axis=1, keepdims=True), 1e-20)  # guard empty rows
        alpha = p * pl.reciprocal(denom, approx=True)                 # softmax over edges
        out_h = jnp.dot(_bf16(alpha), xl_bf[:, sl],
                        preferred_element_type=f32)                   # [TI, C] aggregation
        acts.append(_elu(out_h + bias_ref[:, sl]))
    return acts


def gat_elu_kernel(att_ref, x_tile_ref, x_full_ref, xT_ref, adj_ref,
                   wl_ref, bl_ref, wlT_ref, blT_ref, wr_ref, br_ref, bias_ref,
                   out_ref, *, heads, out_ch):
    acts = _gat_heads(att_ref, x_tile_ref, x_full_ref, xT_ref, adj_ref,
                      wl_ref, bl_ref, wlT_ref, blT_ref, wr_ref, br_ref, bias_ref,
                      heads=heads, out_ch=out_ch)
    for h, act in enumerate(acts):
        out_ref[:, h * out_ch:(h + 1) * out_ch] = act


def gat_final_fused_kernel(att_ref, x_tile_ref, x_full_ref, xT_ref, adj_ref,
                           wl_ref, bl_ref, wlT_ref, blT_ref, wr_ref, br_ref, bias_ref,
                           wp_ref, bp_ref, out_ref, *, heads, out_ch):
    acts = _gat_heads(att_ref, x_tile_ref, x_full_ref, xT_ref, adj_ref,
                      wl_ref, bl_ref, wlT_ref, blT_ref, wr_ref, br_ref, bias_ref,
                      heads=heads, out_ch=out_ch)
    # concat_heads(acts) @ W'  ==  sum_h acts[h] @ W'[h*C:(h+1)*C]  -> no lane concatenate
    acc = jnp.zeros(out_ref.shape, jnp.float32)
    for h, act in enumerate(acts):
        wp_h = wp_ref[h * out_ch:(h + 1) * out_ch, :]
        acc = acc + jnp.dot(_bf16(act), _bf16(wp_h), preferred_element_type=jnp.float32)
    out_ref[...] = _sigmoid(acc + bp_ref[...])


def gat_layer_call(x, adj, p, wprime=None, bprime=None):
    n, f_in = x.shape
    heads, out_ch = p["heads"], p["out_ch"]
    hc = heads * out_ch
    tile_i = _choose_tile(n)
    grid = (pl.cdiv(n, tile_i),)
    x_t = x.T                                           # plain-JAX glue (lane-major xl path)

    in_specs = [
        pl.BlockSpec(memory_space=pltpu.MemorySpace.SMEM),     # att scalars
        pl.BlockSpec((tile_i, f_in), lambda i: (i, 0)),        # x rows of this tile (xr path)
        _full_spec((n, f_in)),                                 # x (source features, xl path)
        _full_spec((f_in, n)),                                 # x^T (xl^T path)
        pl.BlockSpec((tile_i, n), lambda i: (i, 0)),           # adjacency rows (bf16)
        _full_spec(p["wl"].shape), _full_spec(p["bl"].shape),
        _full_spec(p["wl_t"].shape), _full_spec(p["bl_t"].shape),
        _full_spec(p["wr"].shape), _full_spec(p["br"].shape),
        _full_spec(p["bias"].shape),
    ]
    args = [p["att"], x, x, x_t, adj,
            p["wl"], p["bl"], p["wl_t"], p["bl_t"], p["wr"], p["br"], p["bias"]]

    if wprime is not None:
        n_out = wprime.shape[1]
        kernel = functools.partial(gat_final_fused_kernel, heads=heads, out_ch=out_ch)
        in_specs += [_full_spec(wprime.shape), _full_spec(bprime.shape)]
        args += [wprime, bprime]
        fused = True
    else:
        n_out = hc
        kernel = functools.partial(gat_elu_kernel, heads=heads, out_ch=out_ch)
        fused = False

    flops = int(6 * n * f_in * hc + 5 * n * n * hc + 10 * heads * n * n
                + 2 * n * n * hc + (2 * n * hc * n_out if fused else 0))
    transcendentals = int(heads * n * n + (n * n_out if fused else 0))
    bytes_accessed = int(2 * n * n + 3 * 4 * n * f_in + 4 * n * n_out
                         + 4 * (3 * f_in * hc + 4 * hc)
                         + (4 * (hc + 1) * n_out if fused else 0))

    return pl.pallas_call(
        kernel,
        out_shape=jax.ShapeDtypeStruct((n, n_out), jnp.float32),
        grid=grid,
        in_specs=in_specs,
        out_specs=pl.BlockSpec((tile_i, n_out), lambda i: (i, 0)),
        compiler_params=pltpu.CompilerParams(
            dimension_semantics=("parallel",),
            vmem_limit_bytes=48 * 1024 * 1024),
        cost_estimate=pl.CostEstimate(flops=flops, transcendentals=transcendentals,
                                      bytes_accessed=bytes_accessed),
    )(*args)


# ----------------------------------------------------------------------------
# Label-graph path, fully fused:
#   lmat = diag(label_x)/sum(label_x)
#   lmat = elu(Ahat @ (lmat @ W1) + b1);  lmat = elu(Ahat @ (lmat @ W2) + b2)
#   W' = final_w @ lmat;  b' = final_b @ lmat        (folded final linear)
# ----------------------------------------------------------------------------
def label_path_kernel(label_x_ref, ahat_ref, w1_ref, b1_ref, w2_ref, b2_ref,
                      fw_ref, fb_ref, wp_ref, bp_ref):
    f32 = jnp.float32
    lx = label_x_ref[...]                                    # [L, 1]
    L = lx.shape[0]
    total = jnp.sum(lx, keepdims=True)                       # [1, 1]
    row = jax.lax.broadcasted_iota(jnp.int32, (L, L), 0)
    col = jax.lax.broadcasted_iota(jnp.int32, (L, L), 1)
    lmat = jnp.where(row == col, lx, 0.0) / total            # diag(label_x) / sum

    ahat_bf = _bf16(ahat_ref[...])

    h = jnp.dot(_bf16(lmat), _bf16(w1_ref[...]), preferred_element_type=f32)
    h = _elu(jnp.dot(ahat_bf, _bf16(h), preferred_element_type=f32) + b1_ref[...])
    h = jnp.dot(_bf16(h), _bf16(w2_ref[...]), preferred_element_type=f32)
    h = _elu(jnp.dot(ahat_bf, _bf16(h), preferred_element_type=f32) + b2_ref[...])   # [L, L]

    h_bf = _bf16(h)
    wp_ref[...] = jnp.dot(_bf16(fw_ref[...]), h_bf, preferred_element_type=f32)
    bp_ref[...] = jnp.dot(_bf16(fb_ref[...]), h_bf, preferred_element_type=f32)


def label_path_call(label_x_col, ahat, label_convs, final_w, final_b):
    d = final_w.shape[0]
    out_w = label_convs[1]["w"].shape[1]
    vm = lambda: pl.BlockSpec(memory_space=pltpu.MemorySpace.VMEM)
    return pl.pallas_call(
        label_path_kernel,
        out_shape=(jax.ShapeDtypeStruct((d, out_w), jnp.float32),
                   jax.ShapeDtypeStruct((1, out_w), jnp.float32)),
        in_specs=[vm() for _ in range(8)],
        out_specs=(vm(), vm()),
    )(label_x_col, ahat,
      label_convs[0]["w"], label_convs[0]["b"],
      label_convs[1]["w"], label_convs[1]["b"],
      final_w, final_b)


# num_layers == 1 fallback (no conv applied): sigmoid(x @ W' + b')
def final_only_kernel(x_ref, wp_ref, bp_ref, out_ref):
    y = jnp.dot(_bf16(x_ref[...]), _bf16(wp_ref[...]),
                preferred_element_type=jnp.float32) + bp_ref[...]
    out_ref[...] = _sigmoid(y)


def final_only_call(x, wprime, bprime):
    n = x.shape[0]
    n_out = wprime.shape[1]
    vm = lambda: pl.BlockSpec(memory_space=pltpu.MemorySpace.VMEM)
    return pl.pallas_call(
        final_only_kernel,
        out_shape=jax.ShapeDtypeStruct((n, n_out), jnp.float32),
        in_specs=[vm(), vm(), vm()],
        out_specs=vm(),
    )(x, wprime, bprime)


# ----------------------------------------------------------------------------
# Plain-JAX glue: dense adjacency construction (scatter from edge_index).
# TODO(synk): scatter from edge_index has no clean Pallas equivalent; kept as XLA glue.
# ----------------------------------------------------------------------------
def dense_gat_adj(edge_index, n):
    src, dst = edge_index[0], edge_index[1]
    adj = jnp.zeros((n, n), jnp.float32).at[dst, src].set(1.0)
    # GATv2Conv add_self_loops=True (existing self loops replaced with a single one)
    adj = adj.at[jnp.arange(n), jnp.arange(n)].set(1.0)
    return adj.astype(jnp.bfloat16)                      # halve O(N^2) HBM->VMEM traffic


def gcn_norm_dense(edge_index, edge_weight, n):
    src, dst = edge_index[0], edge_index[1]
    a = jnp.zeros((n, n), jnp.float32).at[dst, src].add(edge_weight)
    a = a + jnp.eye(n, dtype=jnp.float32)                # self loops, weight 1.0
    deg = jnp.sum(a, axis=1)                             # weighted in-degree
    dis = jnp.where(deg > 0, 1.0 / jnp.sqrt(deg), 0.0)
    return dis[:, None] * a * dis[None, :]               # D^-1/2 (A + I) D^-1/2


# ----------------------------------------------------------------------------
# Parameter initialization (deterministic, synthetic).
# ----------------------------------------------------------------------------
def _glorot(key, shape):
    limit = jnp.sqrt(6.0 / (shape[0] + shape[1]))
    return jax.random.uniform(key, shape, jnp.float32, -limit, limit)


def init_gatv2(key, f_in, out_ch, heads):
    ks = jax.random.split(key, 6)
    hc = heads * out_ch
    wl = _glorot(ks[0], (f_in, hc))
    bl = 0.01 * jax.random.normal(ks[1], (1, hc), jnp.float32)
    wr = _glorot(ks[2], (f_in, hc))
    br = 0.01 * jax.random.normal(ks[3], (1, hc), jnp.float32)
    return dict(
        wl=wl, bl=bl, wl_t=wl.T, bl_t=bl.T,                  # pre-transposed for the xl^T path
        wr=wr, br=br,
        att=_glorot(ks[4], (heads, out_ch)).reshape(-1),     # flat -> SMEM scalars
        bias=0.01 * jax.random.normal(ks[5], (1, hc), jnp.float32),
        heads=heads, out_ch=out_ch,
    )


def init_gcn(key, f_in, f_out):
    k0, k1 = jax.random.split(key)
    return dict(w=_glorot(k0, (f_in, f_out)),
                b=0.01 * jax.random.normal(k1, (1, f_out), jnp.float32))


def init_params(key, num_features, embedding_size, heads, num_labels, num_conv_layers):
    label_emb = 52
    d = embedding_size * heads
    keys = jax.random.split(key, num_conv_layers + 4)

    convs = []
    if num_conv_layers > 1:
        convs.append(init_gatv2(keys[0], num_features, embedding_size, heads))
        for i in range(num_conv_layers - 2):
            convs.append(init_gatv2(keys[1 + i], heads * embedding_size, embedding_size, heads))
        convs.append(init_gatv2(keys[num_conv_layers - 1], d, embedding_size, heads))
    else:
        convs.append(init_gatv2(keys[0], num_features, embedding_size, heads))

    label_convs = [init_gcn(keys[-4], label_emb, 64),
                   init_gcn(keys[-3], 64, label_emb)]

    kf0, kf1 = jax.random.split(keys[-2])
    final_w = _glorot(kf0, (d, num_labels))              # stored pre-transposed: [in, out]
    final_b = 0.01 * jax.random.normal(kf1, (1, num_labels), jnp.float32)
    # combination_layer from __init__ is unused in forward(); omitted.
    return dict(convs=convs, label_convs=label_convs, final_w=final_w, final_b=final_b,
                num_layers=num_conv_layers)


# ----------------------------------------------------------------------------
# Full forward pass (matches GAT_label.forward, eval mode, return_embeddings=False).
# ----------------------------------------------------------------------------
def gat_label_forward(params, x, edge_index, label_x, label_edge_index, label_edge_weights):
    n = x.shape[0]
    adj = dense_gat_adj(edge_index, n)

    # Label path (independent of the node path; XLA may overlap it with the GAT convs).
    lbl = label_x.reshape(-1, 1).astype(jnp.float32)
    ahat = gcn_norm_dense(label_edge_index, label_edge_weights, lbl.shape[0])
    wprime, bprime = label_path_call(lbl, ahat, params["label_convs"],
                                     params["final_w"], params["final_b"])

    # PyTorch forward applies only num_layers-1 convs; dropout = identity (eval mode).
    applied = params["convs"][:params["num_layers"] - 1]
    if applied:
        for p in applied[:-1]:
            x = gat_layer_call(x, adj, p)                              # GATv2 + ELU
        return gat_layer_call(x, adj, applied[-1], wprime=wprime, bprime=bprime)
    return final_only_call(x, wprime, bprime)


def ring_edges(n):
    idx = jnp.arange(n, dtype=jnp.int32)
    src = jnp.concatenate([idx, (idx + 1) % n])
    dst = jnp.concatenate([(idx + 1) % n, idx])
    return jnp.stack([src, dst], axis=0)


if __name__ == "__main__":
    # Hyperparameters (small, consistent with the module).
    hidden_channels = 32        # unused by forward (as in the PyTorch module)
    embedding_size = 8
    num_features = 8
    num_labels = 52             # must equal label_embedding_size (52) for the final matmul
    num_conv_layers = 2
    heads = 2
    dropout = 0.5               # eval mode -> identity

    key = jax.random.PRNGKey(0)
    k_param, k_x, k_lx, k_lw = jax.random.split(key, 4)

    params = init_params(k_param, num_features, embedding_size, heads, num_labels,
                         num_conv_layers)

    n_nodes = 16
    x = jax.random.normal(k_x, (n_nodes, num_features), jnp.float32)
    edge_index = ring_edges(n_nodes)                                   # [2, 32]

    n_labels = 52
    label_x = jax.random.uniform(k_lx, (n_labels,), jnp.float32, 0.1, 1.0)
    label_edge_index = ring_edges(n_labels)                            # [2, 104]
    label_edge_weights = jax.random.uniform(k_lw, (label_edge_index.shape[1],),
                                            jnp.float32, 0.1, 1.0)

    out = gat_label_forward(params, x, edge_index, label_x, label_edge_index,
                            label_edge_weights)
    out = jax.block_until_ready(out)

    assert out.shape == (n_nodes, num_labels), out.shape
    assert bool(jnp.all(jnp.isfinite(out)))
    assert bool(jnp.all((out >= 0.0) & (out <= 1.0)))
    print("KERNEL_OK")
</pallas_src>

<mosaic_0001>
module attributes {stable_mosaic.version = 11 : i64} {
  func.func @label_path_kernel(%arg0: memref<52x1xf32, #tpu.memory_space<vmem>>, %arg1: memref<52x52xf32, #tpu.memory_space<vmem>>, %arg2: memref<52x64xf32, #tpu.memory_space<vmem>>, %arg3: memref<1x64xf32, #tpu.memory_space<vmem>>, %arg4: memref<64x52xf32, #tpu.memory_space<vmem>>, %arg5: memref<1x52xf32, #tpu.memory_space<vmem>>, %arg6: memref<16x52xf32, #tpu.memory_space<vmem>>, %arg7: memref<1x52xf32, #tpu.memory_space<vmem>>, %arg8: memref<16x52xf32, #tpu.memory_space<vmem>>, %arg9: memref<1x52xf32, #tpu.memory_space<vmem>>) attributes {dimension_semantics = [], scalar_prefetch = 0 : i64, scratch_operands = 0 : i64, tpu.core_type = #tpu.core_type<tc>} {
    %c0 = arith.constant 0 : index
    %c0_0 = arith.constant 0 : index
    %0 = vector.load %arg0[%c0, %c0_0] : memref<52x1xf32, #tpu.memory_space<vmem>>, vector<52x1xf32>
    %1 = vector.shape_cast %0 : vector<52x1xf32> to vector<1x52x1xf32>
    %cst = arith.constant dense<0.000000e+00> : vector<1xf32>
    %2 = vector.multi_reduction <add>, %1, %cst [1, 2] : vector<1x52x1xf32> to vector<1xf32>
    %3 = vector.shape_cast %2 : vector<1xf32> to vector<1x1x1xf32>
    %4 = vector.extract %3[0, 0, 0] : f32 from vector<1x1x1xf32>
    %5 = vector.broadcast %4 : f32 to vector<1x1xf32>
    %6 = tpu.iota {dimensions = array<i32: 0>} : vector<52x52xi32>
    %7 = tpu.iota {dimensions = array<i32: 1>} : vector<52x52xi32>
    %8 = arith.cmpi eq, %6, %7 : vector<52x52xi32>
    %cst_1 = arith.constant 0.000000e+00 : f32
    %9 = vector.shape_cast %0 : vector<52x1xf32> to vector<52x1xf32>
    %10 = vector.broadcast %9 : vector<52x1xf32> to vector<52x52xf32>
    %11 = vector.broadcast %cst_1 : f32 to vector<52x52xf32>
    %12 = arith.select %8, %10, %11 : vector<52x52xi1>, vector<52x52xf32>
    %13 = vector.broadcast %5 : vector<1x1xf32> to vector<52x52xf32>
    %14 = arith.divf %12, %13 : vector<52x52xf32>
    %c0_2 = arith.constant 0 : index
    %c0_3 = arith.constant 0 : index
    %15 = vector.load %arg1[%c0_2, %c0_3] : memref<52x52xf32, #tpu.memory_space<vmem>>, vector<52x52xf32>
    %16 = arith.truncf %15 : vector<52x52xf32> to vector<52x52xbf16>
    %17 = arith.truncf %14 : vector<52x52xf32> to vector<52x52xbf16>
    %c0_4 = arith.constant 0 : index
    %c0_5 = arith.constant 0 : index
    %18 = vector.load %arg2[%c0_4, %c0_5] : memref<52x64xf32, #tpu.memory_space<vmem>>, vector<52x64xf32>
    %19 = arith.truncf %18 : vector<52x64xf32> to vector<52x64xbf16>
    %cst_6 = arith.constant dense<0.000000e+00> : vector<52x64xf32>
    %20 = tpu.matmul %17, %19, %cst_6 {dimension_numbers = #tpu.dot_dimension_numbers<[1], [0], [0], [1], [0, 0, 1, 1], [], []>} : vector<52x52xbf16>, vector<52x64xbf16>, vector<52x64xf32> -> vector<52x64xf32>
    %21 = arith.truncf %20 : vector<52x64xf32> to vector<52x64xbf16>
    %cst_7 = arith.constant dense<0.000000e+00> : vector<52x64xf32>
    %22 = tpu.matmul %16, %21, %cst_7 {dimension_numbers = #tpu.dot_dimension_numbers<[1], [0], [0], [1], [0, 0, 1, 1], [], []>} : vector<52x52xbf16>, vector<52x64xbf16>, vector<52x64xf32> -> vector<52x64xf32>
    %c0_8 = arith.constant 0 : index
    %c0_9 = arith.constant 0 : index
    %23 = vector.load %arg3[%c0_8, %c0_9] : memref<1x64xf32, #tpu.memory_space<vmem>>, vector<1x64xf32>
    %24 = vector.broadcast %23 : vector<1x64xf32> to vector<52x64xf32>
    %25 = arith.addf %22, %24 : vector<52x64xf32>
    %cst_10 = arith.constant 0.000000e+00 : f32
    %26 = vector.broadcast %cst_10 : f32 to vector<52x64xf32>
    %27 = arith.cmpf ogt, %25, %26 : vector<52x64xf32>
    %cst_11 = arith.constant 0.000000e+00 : f32
    %28 = vector.broadcast %cst_11 : f32 to vector<52x64xf32>
    %29 = arith.minimumf %25, %28 : vector<52x64xf32>
    %30 = math.exp %29 : vector<52x64xf32>
    %cst_12 = arith.constant 1.000000e+00 : f32
    %31 = vector.broadcast %cst_12 : f32 to vector<52x64xf32>
    %32 = arith.subf %30, %31 : vector<52x64xf32>
    %33 = arith.select %27, %25, %32 : vector<52x64xi1>, vector<52x64xf32>
    %34 = arith.truncf %33 : vector<52x64xf32> to vector<52x64xbf16>
    %c0_13 = arith.constant 0 : index
    %c0_14 = arith.constant 0 : index
    %35 = vector.load %arg4[%c0_13, %c0_14] : memref<64x52xf32, #tpu.memory_space<vmem>>, vector<64x52xf32>
    %36 = arith.truncf %35 : vector<64x52xf32> to vector<64x52xbf16>
    %cst_15 = arith.constant dense<0.000000e+00> : vector<52x52xf32>
    %37 = tpu.matmul %34, %36, %cst_15 {dimension_numbers = #tpu.dot_dimension_numbers<[1], [0], [0], [1], [0, 0, 1, 1], [], []>} : vector<52x64xbf16>, vector<64x52xbf16>, vector<52x52xf32> -> vector<52x52xf32>
    %38 = arith.truncf %37 : vector<52x52xf32> to vector<52x52xbf16>
    %cst_16 = arith.constant dense<0.000000e+00> : vector<52x52xf32>
    %39 = tpu.matmul %16, %38, %cst_16 {dimension_numbers = #tpu.dot_dimension_numbers<[1], [0], [0], [1], [0, 0, 1, 1], [], []>} : vector<52x52xbf16>, vector<52x52xbf16>, vector<52x52xf32> -> vector<52x52xf32>
    %c0_17 = arith.constant 0 : index
    %c0_18 = arith.constant 0 : index
    %40 = vector.load %arg5[%c0_17, %c0_18] : memref<1x52xf32, #tpu.memory_space<vmem>>, vector<1x52xf32>
    %41 = vector.broadcast %40 : vector<1x52xf32> to vector<52x52xf32>
    %42 = arith.addf %39, %41 : vector<52x52xf32>
    %cst_19 = arith.constant 0.000000e+00 : f32
    %43 = vector.broadcast %cst_19 : f32 to vector<52x52xf32>
    %44 = arith.cmpf ogt, %42, %43 : vector<52x52xf32>
    %cst_20 = arith.constant 0.000000e+00 : f32
    %45 = vector.broadcast %cst_20 : f32 to vector<52x52xf32>
    %46 = arith.minimumf %42, %45 : vector<52x52xf32>
    %47 = math.exp %46 : vector<52x52xf32>
    %cst_21 = arith.constant 1.000000e+00 : f32
    %48 = vector.broadcast %cst_21 : f32 to vector<52x52xf32>
    %49 = arith.subf %47, %48 : vector<52x52xf32>
    %50 = arith.select %44, %42, %49 : vector<52x52xi1>, vector<52x52xf32>
    %51 = arith.truncf %50 : vector<52x52xf32> to vector<52x52xbf16>
    %c0_22 = arith.constant 0 : index
    %c0_23 = arith.constant 0 : index
    %52 = vector.load %arg6[%c0_22, %c0_23] : memref<16x52xf32, #tpu.memory_space<vmem>>, vector<16x52xf32>
    %53 = arith.truncf %52 : vector<16x52xf32> to vector<16x52xbf16>
    %cst_24 = arith.constant dense<0.000000e+00> : vector<16x52xf32>
    %54 = tpu.matmul %53, %51, %cst_24 {dimension_numbers = #tpu.dot_dimension_numbers<[1], [0], [0], [1], [0, 0, 1, 1], [], []>} : vector<16x52xbf16>, vector<52x52xbf16>, vector<16x52xf32> -> vector<16x52xf32>
    %c0_25 = arith.constant 0 : index
    %c0_26 = arith.constant 0 : index
    %55 = vector.load %arg8[%c0_25, %c0_26] : memref<16x52xf32, #tpu.memory_space<vmem>>, vector<16x52xf32>
    tpu.vector_store %arg8[%c0_25, %c0_26], %54 {strides = array<i32>} : memref<16x52xf32, #tpu.memory_space<vmem>>, vector<16x52xf32>,
    %c0_27 = arith.constant 0 : index
    %c0_28 = arith.constant 0 : index
    %56 = vector.load %arg7[%c0_27, %c0_28] : memref<1x52xf32, #tpu.memory_space<vmem>>, vector<1x52xf32>
    %57 = arith.truncf %56 : vector<1x52xf32> to vector<1x52xbf16>
    %cst_29 = arith.constant dense<0.000000e+00> : vector<1x52xf32>
    %58 = tpu.matmul %57, %51, %cst_29 {dimension_numbers = #tpu.dot_dimension_numbers<[1], [0], [0], [1], [0, 0, 1, 1], [], []>} : vector<1x52xbf16>, vector<52x52xbf16>, vector<1x52xf32> -> vector<1x52xf32>
    %c0_30 = arith.constant 0 : index
    %c0_31 = arith.constant 0 : index
    %59 = vector.load %arg9[%c0_30, %c0_31] : memref<1x52xf32, #tpu.memory_space<vmem>>, vector<1x52xf32>
    tpu.vector_store %arg9[%c0_30, %c0_31], %58 {strides = array<i32>} : memref<1x52xf32, #tpu.memory_space<vmem>>, vector<1x52xf32>,
    return
  }
}

</mosaic_0001>

<llo_original>
// kernel: tpu_custom_call.1
$region0: #{tpu_custom_call.1}
  #allocation0 [shape = 'u32[]', space=smem, size = 0x4, offset = 0x4, fixed_abs, tag = 'smem constant byte address 0x4 - core index']
  #allocation1 [shape = 'u32[144,128]{1,0:T(1,128)}', space=vmem, size = 0x12000, scoped, tag = 'internal scratch']
  %s0 = inlined_call_operand.vmem [shape: f32[52,1], index: 0, kind: input, shape index: {}]
  %s1 = inlined_call_operand.vmem [shape: f32[52,52], index: 1, kind: input, shape index: {}]
  %s2 = inlined_call_operand.vmem [shape: f32[52,64], index: 2, kind: input, shape index: {}]
  %s3 = inlined_call_operand.hbm [shape: f32[1,64], index: 3, kind: input, shape index: {}]
  %s4 = inlined_call_operand.vmem [shape: f32[64,52], index: 4, kind: input, shape index: {}]
  %s5 = inlined_call_operand.hbm [shape: f32[1,52], index: 5, kind: input, shape index: {}]
  %s6 = inlined_call_operand.vmem [shape: f32[16,52], index: 6, kind: input, shape index: {}]
  %s7 = inlined_call_operand.vmem [shape: f32[1,52], index: 7, kind: input, shape index: {}]
  %s8 = inlined_call_operand.hbm [shape: f32[16,52], index: 8, kind: output, shape index: {0}]
  %s9 = inlined_call_operand.hbm [shape: f32[1,52], index: 9, kind: output, shape index: {1}]
  %10 = xla_tuple %s8, %s9
  %s11 = sld [smem:[#allocation0]]
  $region58: #{tpu_custom_call.1} parent=0
    _
  %s13 = ssub.s32 1, %s11
  %s14 = scalar_select 0, %s13, %s11
  $region1: #{tpu_custom_call.1} parent=0
    #allocation2 [shape = 'u8[512]{0}', space=vmem, size = 0x400, scoped, tag = 'input window, operand 3, single buffered']
    #allocation3 [shape = 's32[1]{0}', space=sflag, size = 0x4, scoped, tag = 'scoped memory for tpu_custom_call.1']
    #allocation4 [shape = 's32[1]{0}', space=sflag, size = 0x4, scoped, tag = 'scoped memory for tpu_custom_call.1']
    #allocation5 [shape = 'u8[512]{0}', space=vmem, size = 0x400, scoped, tag = 'input window, operand 5, single buffered']
    #allocation6 [shape = 's32[1]{0}', space=sflag, size = 0x4, scoped, tag = 'scoped memory for tpu_custom_call.1']
    #allocation7 [shape = 'u8[8192]{0}', space=vmem, size = 0x2000, scoped, tag = 'output window, operand 0, single buffered']
    #allocation8 [shape = 'u8[512]{0}', space=vmem, size = 0x400, scoped, tag = 'output window, operand 1, single buffered']
    #allocation9 [shape = 's32[1]{0}', space=sflag, size = 0x4, scoped, tag = 'scoped memory for tpu_custom_call.1']
    %15 = vsyncpa [#allocation3], 0
    %16 = vsyncpa [#allocation6], 0
    %17 = vsyncpa [#allocation4], 0
    %18 = vsyncpa [#allocation9], 0
    // Predicated region
    $region2: #{tpu_custom_call.1} parent=1 // pred_check
      _
    $region3: #{tpu_custom_call.1} parent=1 // pred_check_branch
      %20 = sbr.rel (0) target = $region5
    $region4: #{tpu_custom_call.1} parent=1 // pred_region
      _
    $region5: #{tpu_custom_call.1} parent=1 // pred_fallthru
      _
    // Predicated region
    $region6: #{tpu_custom_call.1} parent=1 // pred_check
      _
    $region7: #{tpu_custom_call.1} parent=1 // pred_check_branch
      %22 = sbr.rel (0) target = $region9
    $region8: #{tpu_custom_call.1} parent=1 // pred_region
      _
    $region9: #{tpu_custom_call.1} parent=1 // pred_fallthru
      _
    // Predicated region
    $region10: #{tpu_custom_call.1} parent=1 // pred_check
      _
    $region11: #{tpu_custom_call.1} parent=1 // pred_check_branch
      %24 = sbr.rel (0) target = $region13
    $region12: #{tpu_custom_call.1} parent=1 // pred_region
      _
    $region13: #{tpu_custom_call.1} parent=1 // pred_fallthru
      _
    // Predicated region
    $region14: #{tpu_custom_call.1} parent=1 // pred_check
      _
    $region15: #{tpu_custom_call.1} parent=1 // pred_check_branch
      %26 = sbr.rel (0) target = $region17
    $region16: #{tpu_custom_call.1} parent=1 // pred_region
      %s28 = ssub.s32 16, 16
      %29 = vsyncadd [#allocation3], %s28
      %s31 = sshll.u32 [#allocation2], 4
      %s32 = int_to_ptr.vmem [resolvable:$true] %s31
      %34 = dma.hbm_to_vmem [thread:$0]  %s3, 16, %s32, [#allocation3]
    $region17: #{tpu_custom_call.1} parent=1 // pred_fallthru
      _
    // Predicated region
    $region18: #{tpu_custom_call.1} parent=1 // pred_check
      _
    $region19: #{tpu_custom_call.1} parent=1 // pred_check_branch
      %36 = sbr.rel (0) target = $region21
    $region20: #{tpu_custom_call.1} parent=1 // pred_region
      _
    $region21: #{tpu_custom_call.1} parent=1 // pred_fallthru
      _
    // Predicated region
    $region22: #{tpu_custom_call.1} parent=1 // pred_check
      _
    $region23: #{tpu_custom_call.1} parent=1 // pred_check_branch
      %38 = sbr.rel (0) target = $region25
    $region24: #{tpu_custom_call.1} parent=1 // pred_region
      %s40 = ssub.s32 16, 16
      %41 = vsyncadd [#allocation6], %s40
      %s43 = sshll.u32 [#allocation5], 4
      %s44 = int_to_ptr.vmem [resolvable:$true] %s43
      %46 = dma.hbm_to_vmem [thread:$0]  %s5, 16, %s44, [#allocation6]
    $region25: #{tpu_custom_call.1} parent=1 // pred_fallthru
      _
    // Predicated region
    $region26: #{tpu_custom_call.1} parent=1 // pred_check
      _
    $region27: #{tpu_custom_call.1} parent=1 // pred_check_branch
      %48 = sbr.rel (0) target = $region29
    $region28: #{tpu_custom_call.1} parent=1 // pred_region
      _
    $region29: #{tpu_custom_call.1} parent=1 // pred_fallthru
      _
    // Predicated region
    $region30: #{tpu_custom_call.1} parent=1 // pred_check
      _
    $region31: #{tpu_custom_call.1} parent=1 // pred_check_branch
      %50 = sbr.rel (0) target = $region33
    $region32: #{tpu_custom_call.1} parent=1 // pred_region
      _
    $region33: #{tpu_custom_call.1} parent=1 // pred_fallthru
      _
    // Predicated region
    $region34: #{tpu_custom_call.1} parent=1 // pred_check
      _
    $region35: #{tpu_custom_call.1} parent=1 // pred_check_branch
      %52 = sbr.rel (0) target = $region37
    $region36: #{tpu_custom_call.1} parent=1 // pred_region
      %53 = dma.done [#allocation3], 16
    $region37: #{tpu_custom_call.1} parent=1 // pred_fallthru
      _
    // Predicated region
    $region38: #{tpu_custom_call.1} parent=1 // pred_check
      _
    $region39: #{tpu_custom_call.1} parent=1 // pred_check_branch
      %55 = sbr.rel (0) target = $region41
    $region40: #{tpu_custom_call.1} parent=1 // pred_region
      %56 = dma.done [#allocation6], 16
    $region41: #{tpu_custom_call.1} parent=1 // pred_fallthru
      _
    %v58 = vld [vmem:[%s0] sm:$0xff]
    %v59 = vld [vmem:[%s0 + $0x8] sm:$0xff]
    %v60 = vld [vmem:[%s0 + $0x10] sm:$0xff]
    %v61 = vld [vmem:[%s0 + $0x18] sm:$0xff]
    %v62 = vld [vmem:[%s0 + $0x20] sm:$0xff]
    %v63 = vld [vmem:[%s0 + $0x28] sm:$0xff]
    %v64 = vld [vmem:[%s0 + $0x30] sm:$0xf]
    %vm65 = vcmask 7168
    %v66 = vsel %vm65, %v58, 0.0
    %v67 = vsel %vm65, %v59, 0.0
    %v68 = vadd.f32 %v66, %v67
    %v69 = vsel %vm65, %v60, 0.0
    %v70 = vadd.f32 %v68, %v69
    %v71 = vsel %vm65, %v61, 0.0
    %v72 = vadd.f32 %v70, %v71
    %v73 = vsel %vm65, %v62, 0.0
    %v74 = vadd.f32 %v72, %v73
    %v75 = vsel %vm65, %v63, 0.0
    %v76 = vadd.f32 %v74, %v75
    %vm77 = vcmask 3072
    %v78 = vsel %vm77, %v64, 0.0
    %v79 = vadd.f32 %v76, %v78
    %80 = vadd.xlane.f32.xlu0 %v79
    %v81 = vpop.xlane.xlu0 %80
    %v82 = vrot.slane %v81, 4
    %v83 = vadd.f32 %v81, %v82
    %v84 = vrot.slane %v83, 2
    %v85 = vadd.f32 %v83, %v84
    %v86 = vrot.slane %v85, 1
    %v87 = vadd.f32 %v85, %v86
    %s88 = vtos %v87
    %v89 = vlaneseq
    %v90 = vshrl.u32 %v89, 7
    %v91 = vadd.s32 %v90, 8
    %v92 = vadd.s32 %v90, 16
    %v93 = vadd.s32 %v90, 24
    %v94 = vadd.s32 %v90, 32
    %v95 = vadd.s32 %v90, 40
    %v96 = vadd.s32 %v90, 48
    %v97 = vlaneseq
    %v98 = vand.u32 %v97, 127
    %vm99 = vcmp.eq.s32.totalorder %v90, %v98
    %vm100 = vcmp.eq.s32.totalorder %v91, %v98
    %vm101 = vcmp.eq.s32.totalorder %v92, %v98
    %vm102 = vcmp.eq.s32.totalorder %v93, %v98
    %vm103 = vcmp.eq.s32.totalorder %v94, %v98
    %vm104 = vcmp.eq.s32.totalorder %v95, %v98
    %vm105 = vcmp.eq.s32.totalorder %v96, %v98
    %107 = vset.pattern.permute.xlu0 0
    %108 = vperm.xlu0 %107, %v58
    %v109 = vpop.permute.xlu0 %108
    %112 = vset.pattern.permute.xlu0 0
    %113 = vperm.xlu0 %112, %v59
    %v114 = vpop.permute.xlu0 %113
    %117 = vset.pattern.permute.xlu0 0
    %118 = vperm.xlu0 %117, %v60
    %v119 = vpop.permute.xlu0 %118
    %122 = vset.pattern.permute.xlu0 0
    %123 = vperm.xlu0 %122, %v61
    %v124 = vpop.permute.xlu0 %123
    %127 = vset.pattern.permute.xlu0 0
    %128 = vperm.xlu0 %127, %v62
    %v129 = vpop.permute.xlu0 %128
    %132 = vset.pattern.permute.xlu0 0
    %133 = vperm.xlu0 %132, %v63
    %v134 = vpop.permute.xlu0 %133
    %137 = vset.pattern.permute.xlu0 0
    %138 = vperm.xlu0 %137, %v64
    %v139 = vpop.permute.xlu0 %138
    %v141 = vsel %vm99, %v109, 0.0
    %v142 = vsel %vm100, %v114, 0.0
    %v143 = vsel %vm101, %v119, 0.0
    %v144 = vsel %vm102, %v124, 0.0
    %v145 = vsel %vm103, %v129, 0.0
    %v146 = vsel %vm104, %v134, 0.0
    %v147 = vsel %vm105, %v139, 0.0
    %v148 = vstv %s88
    %v149 = vrcp.pop %v148
    %v150 = vmul.f32 %v141, %v149
    %v151 = vmul.f32 %v142, %v149
    %v152 = vmul.f32 %v143, %v149
    %v153 = vmul.f32 %v144, %v149
    %v154 = vmul.f32 %v145, %v149
    %v155 = vmul.f32 %v146, %v149
    %v156 = vmul.f32 %v147, %v149
    %v157 = vld [vmem:[%s1] sm:$0xff]
    %v158 = vld [vmem:[%s1 + $0x8] sm:$0xff]
    %v159 = vld [vmem:[%s1 + $0x10] sm:$0xff]
    %v160 = vld [vmem:[%s1 + $0x18] sm:$0xff]
    %v161 = vld [vmem:[%s1 + $0x20] sm:$0xff]
    %v162 = vld [vmem:[%s1 + $0x28] sm:$0xff]
    %v163 = vld [vmem:[%s1 + $0x30] sm:$0xf]
    %v164 = vpack.c.bf16 %v158, %v157
    %v165 = vpack.c.bf16 %v160, %v159
    %v166 = vpack.c.bf16 %v162, %v161
    %v167 = vpack.c.bf16 %v163, %v163
    %v168 = vpack.c.bf16 %v151, %v150
    %v169 = vpack.c.bf16 %v153, %v152
    %v170 = vpack.c.bf16 %v155, %v154
    %v171 = vpack.c.bf16 %v156, %v156
    %v172 = vld [vmem:[%s2] sm:$0xff]
    %v173 = vld [vmem:[%s2 + $0x8] sm:$0xff]
    %v174 = vld [vmem:[%s2 + $0x10] sm:$0xff]
    %v175 = vld [vmem:[%s2 + $0x18] sm:$0xff]
    %v176 = vld [vmem:[%s2 + $0x20] sm:$0xff]
    %v177 = vld [vmem:[%s2 + $0x28] sm:$0xff]
    %v178 = vld [vmem:[%s2 + $0x30] sm:$0xf]
    %v179 = vpack.c.bf16 %v173, %v172
    %v180 = vpack.c.bf16 %v175, %v174
    %v181 = vpack.c.bf16 %v177, %v176
    %v182 = vpack.c.bf16 %v178, %v178
    %vm183 = vcmask 424960
    %v185 = vsel %vm183, %v168, 0
    %v188 = vsel %vm183, %v169, 0
    %v191 = vsel %vm183, %v170, 0
    %v194 = vsel %vm183, %v171, 0
    %vm196 = vcmask 1041408
    %v198 = vsel %vm196, %v182, 0
    %200 = vmatprep.subr.bf16.mxu0 0
    %201 = vmatpush1.bf16.msra.mxu0 0
    %202 = vmatprep.subr.bf16.mxu0 0
    %203 = vmatpush1.bf16.msra.mxu0 0
    %204 = vmatprep.subr.bf16.mxu0 0
    %205 = vmatpush1.bf16.msra.mxu0 0
    %206 = vmatprep.subr.bf16.mxu0 0
    %207 = vmatpush1.bf16.msra.mxu0 0
    %208 = vmatprep.subr.bf16.mxu0 0
    %209 = vmatpush1.bf16.msra.mxu0 %v198
    %210 = vmatprep.subr.bf16.mxu0 0
    %211 = vmatpush1.bf16.msra.mxu0 %v181
    %212 = vmatprep.subr.bf16.mxu0 0
    %213 = vmatpush1.bf16.msra.mxu0 %v180
    %214 = vmatprep.subr.bf16.mxu0 0
    %215 = vmatpush1.bf16.msra.mxu0 %v179
    %216 = vmatprep.subr.bf16.mxu0 0
    %217 = vmatpush2.bf16.msra.mxu0 0
    %218 = vmatprep.subr.bf16.mxu0 0
    %219 = vmatpush2.bf16.msra.mxu0 0
    %220 = vmatprep.subr.bf16.mxu0 0
    %221 = vmatpush2.bf16.msra.mxu0 0
    %222 = vmatprep.subr.bf16.mxu0 0
    %223 = vmatpush2.bf16.msra.mxu0 0
    %224 = vmatprep.subr.bf16.mxu0 0
    %225 = vmatpush2.bf16.msra.mxu0 0
    %226 = vmatprep.subr.bf16.mxu0 0
    %227 = vmatpush2.bf16.msra.mxu0 0
    %228 = vmatprep.subr.bf16.mxu0 0
    %229 = vmatpush2.bf16.msra.mxu0 0
    %230 = vmatprep.subr.bf16.mxu0 0
    %231 = vmatpush2.bf16.msra.mxu0 0
    %232 = vmatprep.mubr.bf16.mxu0 0
    %233 = vmatmul.mubr.bf16.gmra.mxu0 %v185
    %v234 = vpop.f32.mrf.mxu0
    %v235 = vadd.f32 0.0, %v234
    %v236 = vpop.f32.mrf.mxu0
    %v237 = vpop.f32.mrf.mxu0
    %v238 = vadd.f32 0.0, %v237
    %v239 = vpop.f32.mrf.mxu0
    %240 = vmatprep.mubr.bf16.mxu0 0
    %241 = vmatmul.mubr.bf16.gmra.mxu0 %v188
    %v242 = vpop.f32.mrf.mxu0
    %v243 = vadd.f32 0.0, %v242
    %v244 = vpop.f32.mrf.mxu0
    %v245 = vpop.f32.mrf.mxu0
    %v246 = vadd.f32 0.0, %v245
    %v247 = vpop.f32.mrf.mxu0
    %248 = vmatprep.mubr.bf16.mxu0 0
    %249 = vmatmul.mubr.bf16.gmra.mxu0 %v191
    %v250 = vpop.f32.mrf.mxu0
    %v251 = vadd.f32 0.0, %v250
    %v252 = vpop.f32.mrf.mxu0
    %v253 = vpop.f32.mrf.mxu0
    %v254 = vadd.f32 0.0, %v253
    %v255 = vpop.f32.mrf.mxu0
    %256 = vmatprep.mubr.bf16.mxu0 0
    %257 = vmatmul.mubr.bf16.gmra.mxu0 %v194
    %v258 = vpop.f32.mrf.mxu0
    %v259 = vadd.f32 0.0, %v258
    %v260 = vpop.f32.mrf.mxu0
    %v261 = vpop.f32.mrf.mxu0
    %v262 = vpop.f32.mrf.mxu0
    %263 = vdwg.mxu0
    %v264 = vpack.c.bf16 %v238, %v235
    %v265 = vpack.c.bf16 %v246, %v243
    %v266 = vpack.c.bf16 %v254, %v251
    %v267 = vpack.c.bf16 %v259, %v259
    %v268 = vld [vmem:[#allocation2] sm:$0x1]
    %v270 = vlaneseq
    %v271 = vshrl.u32 %v270, 7
    %v272 = vsub.s32 0, %v271
    %v273 = vrot.slane %v268, %v272
    %v276 = vsel %vm183, %v164, 0
    %v279 = vsel %vm183, %v165, 0
    %v282 = vsel %vm183, %v166, 0
    %v285 = vsel %vm183, %v167, 0
    %v288 = vsel %vm196, %v267, 0
    %290 = vmatprep.subr.bf16.mxu0 0
    %291 = vmatpush1.bf16.msra.mxu0 0
    %292 = vmatprep.subr.bf16.mxu0 0
    %293 = vmatpush1.bf16.msra.mxu0 0
    %294 = vmatprep.subr.bf16.mxu0 0
    %295 = vmatpush1.bf16.msra.mxu0 0
    %296 = vmatprep.subr.bf16.mxu0 0
    %297 = vmatpush1.bf16.msra.mxu0 0
    %298 = vmatprep.subr.bf16.mxu0 0
    %299 = vmatpush1.bf16.msra.mxu0 %v288
    %300 = vmatprep.subr.bf16.mxu0 0
    %301 = vmatpush1.bf16.msra.mxu0 %v266
    %302 = vmatprep.subr.bf16.mxu0 0
    %303 = vmatpush1.bf16.msra.mxu0 %v265
    %304 = vmatprep.subr.bf16.mxu0 0
    %305 = vmatpush1.bf16.msra.mxu0 %v264
    %306 = vmatprep.subr.bf16.mxu0 0
    %307 = vmatpush2.bf16.msra.mxu0 0
    %308 = vmatprep.subr.bf16.mxu0 0
    %309 = vmatpush2.bf16.msra.mxu0 0
    %310 = vmatprep.subr.bf16.mxu0 0
    %311 = vmatpush2.bf16.msra.mxu0 0
    %312 = vmatprep.subr.bf16.mxu0 0
    %313 = vmatpush2.bf16.msra.mxu0 0
    %314 = vmatprep.subr.bf16.mxu0 0
    %315 = vmatpush2.bf16.msra.mxu0 0
    %316 = vmatprep.subr.bf16.mxu0 0
    %317 = vmatpush2.bf16.msra.mxu0 0
    %318 = vmatprep.subr.bf16.mxu0 0
    %319 = vmatpush2.bf16.msra.mxu0 0
    %320 = vmatprep.subr.bf16.mxu0 0
    %321 = vmatpush2.bf16.msra.mxu0 0
    %322 = vmatprep.mubr.bf16.mxu0 0
    %323 = vmatmul.mubr.bf16.gmra.mxu0 %v276
    %v324 = vpop.f32.mrf.mxu0
    %v325 = vadd.f32 %v273, %v324
    %v326 = vpop.f32.mrf.mxu0
    %v327 = vpop.f32.mrf.mxu0
    %v328 = vadd.f32 %v273, %v327
    %v329 = vpop.f32.mrf.mxu0
    %330 = vmatprep.mubr.bf16.mxu0 0
    %331 = vmatmul.mubr.bf16.gmra.mxu0 %v279
    %v332 = vpop.f32.mrf.mxu0
    %v333 = vadd.f32 %v273, %v332
    %v334 = vpop.f32.mrf.mxu0
    %v335 = vpop.f32.mrf.mxu0
    %v336 = vadd.f32 %v273, %v335
    %v337 = vpop.f32.mrf.mxu0
    %338 = vmatprep.mubr.bf16.mxu0 0
    %339 = vmatmul.mubr.bf16.gmra.mxu0 %v282
    %v340 = vpop.f32.mrf.mxu0
    %v341 = vadd.f32 %v273, %v340
    %v342 = vpop.f32.mrf.mxu0
    %v343 = vpop.f32.mrf.mxu0
    %v344 = vadd.f32 %v273, %v343
    %v345 = vpop.f32.mrf.mxu0
    %346 = vmatprep.mubr.bf16.mxu0 0
    %347 = vmatmul.mubr.bf16.gmra.mxu0 %v285
    %v348 = vpop.f32.mrf.mxu0
    %v349 = vadd.f32 %v273, %v348
    %v350 = vpop.f32.mrf.mxu0
    %v351 = vpop.f32.mrf.mxu0
    %v352 = vpop.f32.mrf.mxu0
    %353 = vdwg.mxu0
    %vm354 = vcmp.gt.f32.partialorder %v325, 0.0
    %vm355 = vcmp.gt.f32.partialorder %v328, 0.0
    %vm356 = vcmp.gt.f32.partialorder %v333, 0.0
    %vm357 = vcmp.gt.f32.partialorder %v336, 0.0
    %vm358 = vcmp.gt.f32.partialorder %v341, 0.0
    %vm359 = vcmp.gt.f32.partialorder %v344, 0.0
    %vm360 = vcmp.gt.f32.partialorder %v349, 0.0
    %v361 = vmin.f32 %v325, 0.0
    %v362 = vmin.f32 %v328, 0.0
    %v363 = vmin.f32 %v333, 0.0
    %v364 = vmin.f32 %v336, 0.0
    %v365 = vmin.f32 %v341, 0.0
    %v366 = vmin.f32 %v344, 0.0
    %v367 = vmin.f32 %v349, 0.0
    %v368 = vmul.f32 %v361, 1.442695
    %v369 = vpow.pop %v368
    %v370 = vmul.f32 %v362, 1.442695
    %v371 = vpow.pop %v370
    %v372 = vmul.f32 %v363, 1.442695
    %v373 = vpow.pop %v372
    %v374 = vmul.f32 %v364, 1.442695
    %v375 = vpow.pop %v374
    %v376 = vmul.f32 %v365, 1.442695
    %v377 = vpow.pop %v376
    %v378 = vmul.f32 %v366, 1.442695
    %v379 = vpow.pop %v378
    %v380 = vmul.f32 %v367, 1.442695
    %v381 = vpow.pop %v380
    %v382 = vsub.f32 %v369, 1.0
    %v383 = vsub.f32 %v371, 1.0
    %v384 = vsub.f32 %v373, 1.0
    %v385 = vsub.f32 %v375, 1.0
    %v386 = vsub.f32 %v377, 1.0
    %v387 = vsub.f32 %v379, 1.0
    %v388 = vsub.f32 %v381, 1.0
    %v389 = vsel %vm354, %v325, %v382
    %v390 = vsel %vm355, %v328, %v383
    %v391 = vsel %vm356, %v333, %v384
    %v392 = vsel %vm357, %v336, %v385
    %v393 = vsel %vm358, %v341, %v386
    %v394 = vsel %vm359, %v344, %v387
    %v395 = vsel %vm360, %v349, %v388
    %v396 = vpack.c.bf16 %v390, %v389
    %v397 = vpack.c.bf16 %v392, %v391
    %v398 = vpack.c.bf16 %v394, %v393
    %v399 = vpack.c.bf16 %v395, %v395
    %v400 = vld [vmem:[%s4] sm:$0xff]
    %v401 = vld [vmem:[%s4 + $0x8] sm:$0xff]
    %v402 = vld [vmem:[%s4 + $0x10] sm:$0xff]
    %v403 = vld [vmem:[%s4 + $0x18] sm:$0xff]
    %v404 = vld [vmem:[%s4 + $0x20] sm:$0xff]
    %v405 = vld [vmem:[%s4 + $0x28] sm:$0xff]
    %v406 = vld [vmem:[%s4 + $0x30] sm:$0xff]
    %v407 = vld [vmem:[%s4 + $0x38] sm:$0xff]
    %v408 = vpack.c.bf16 %v401, %v400
    %v409 = vpack.c.bf16 %v403, %v402
    %v410 = vpack.c.bf16 %v405, %v404
    %v411 = vpack.c.bf16 %v407, %v406
    %vm412 = vcmask 523264
    %v414 = vsel %vm412, %v396, 0
    %v417 = vsel %vm412, %v397, 0
    %v420 = vsel %vm412, %v398, 0
    %v423 = vsel %vm412, %v399, 0
    %425 = vmatprep.subr.bf16.mxu0 0
    %426 = vmatpush1.bf16.msra.mxu0 0
    %427 = vmatprep.subr.bf16.mxu0 0
    %428 = vmatpush1.bf16.msra.mxu0 0
    %429 = vmatprep.subr.bf16.mxu0 0
    %430 = vmatpush1.bf16.msra.mxu0 0
    %431 = vmatprep.subr.bf16.mxu0 0
    %432 = vmatpush1.bf16.msra.mxu0 0
    %433 = vmatprep.subr.bf16.mxu0 0
    %434 = vmatpush1.bf16.msra.mxu0 %v411
    %435 = vmatprep.subr.bf16.mxu0 0
    %436 = vmatpush1.bf16.msra.mxu0 %v410
    %437 = vmatprep.subr.bf16.mxu0 0
    %438 = vmatpush1.bf16.msra.mxu0 %v409
    %439 = vmatprep.subr.bf16.mxu0 0
    %440 = vmatpush1.bf16.msra.mxu0 %v408
    %441 = vmatprep.subr.bf16.mxu0 0
    %442 = vmatpush2.bf16.msra.mxu0 0
    %443 = vmatprep.subr.bf16.mxu0 0
    %444 = vmatpush2.bf16.msra.mxu0 0
    %445 = vmatprep.subr.bf16.mxu0 0
    %446 = vmatpush2.bf16.msra.mxu0 0
    %447 = vmatprep.subr.bf16.mxu0 0
    %448 = vmatpush2.bf16.msra.mxu0 0
    %449 = vmatprep.subr.bf16.mxu0 0
    %450 = vmatpush2.bf16.msra.mxu0 0
    %451 = vmatprep.subr.bf16.mxu0 0
    %452 = vmatpush2.bf16.msra.mxu0 0
    %453 = vmatprep.subr.bf16.mxu0 0
    %454 = vmatpush2.bf16.msra.mxu0 0
    %455 = vmatprep.subr.bf16.mxu0 0
    %456 = vmatpush2.bf16.msra.mxu0 0
    %457 = vmatprep.mubr.bf16.mxu0 0
    %458 = vmatmul.mubr.bf16.gmra.mxu0 %v414
    %v459 = vpop.f32.mrf.mxu0
    %v460 = vadd.f32 0.0, %v459
    %v461 = vpop.f32.mrf.mxu0
    %v462 = vpop.f32.mrf.mxu0
    %v463 = vadd.f32 0.0, %v462
    %v464 = vpop.f32.mrf.mxu0
    %465 = vmatprep.mubr.bf16.mxu0 0
    %466 = vmatmul.mubr.bf16.gmra.mxu0 %v417
    %v467 = vpop.f32.mrf.mxu0
    %v468 = vadd.f32 0.0, %v467
    %v469 = vpop.f32.mrf.mxu0
    %v470 = vpop.f32.mrf.mxu0
    %v471 = vadd.f32 0.0, %v470
    %v472 = vpop.f32.mrf.mxu0
    %473 = vmatprep.mubr.bf16.mxu0 0
    %474 = vmatmul.mubr.bf16.gmra.mxu0 %v420
    %v475 = vpop.f32.mrf.mxu0
    %v476 = vadd.f32 0.0, %v475
    %v477 = vpop.f32.mrf.mxu0
    %v478 = vpop.f32.mrf.mxu0
    %v479 = vadd.f32 0.0, %v478
    %v480 = vpop.f32.mrf.mxu0
    %481 = vmatprep.mubr.bf16.mxu0 0
    %482 = vmatmul.mubr.bf16.gmra.mxu0 %v423
    %v483 = vpop.f32.mrf.mxu0
    %v484 = vadd.f32 0.0, %v483
    %v485 = vpop.f32.mrf.mxu0
    %v486 = vpop.f32.mrf.mxu0
    %v487 = vpop.f32.mrf.mxu0
    %488 = vdwg.mxu0
    %v489 = vpack.c.bf16 %v463, %v460
    %v490 = vpack.c.bf16 %v471, %v468
    %v491 = vpack.c.bf16 %v479, %v476
    %v492 = vpack.c.bf16 %v484, %v484
    %v493 = vld [vmem:[#allocation5] sm:$0x1]
    %v495 = vlaneseq
    %v496 = vshrl.u32 %v495, 7
    %v497 = vsub.s32 0, %v496
    %v498 = vrot.slane %v493, %v497
    %v501 = vsel %vm196, %v492, 0
    %503 = vmatprep.subr.bf16.mxu0 0
    %504 = vmatpush1.bf16.msra.mxu0 0
    %505 = vmatprep.subr.bf16.mxu0 0
    %506 = vmatpush1.bf16.msra.mxu0 0
    %507 = vmatprep.subr.bf16.mxu0 0
    %508 = vmatpush1.bf16.msra.mxu0 0
    %509 = vmatprep.subr.bf16.mxu0 0
    %510 = vmatpush1.bf16.msra.mxu0 0
    %511 = vmatprep.subr.bf16.mxu0 0
    %512 = vmatpush1.bf16.msra.mxu0 %v501
    %513 = vmatprep.subr.bf16.mxu0 0
    %514 = vmatpush1.bf16.msra.mxu0 %v491
    %515 = vmatprep.subr.bf16.mxu0 0
    %516 = vmatpush1.bf16.msra.mxu0 %v490
    %517 = vmatprep.subr.bf16.mxu0 0
    %518 = vmatpush1.bf16.msra.mxu0 %v489
    %519 = vmatprep.subr.bf16.mxu0 0
    %520 = vmatpush2.bf16.msra.mxu0 0
    %521 = vmatprep.subr.bf16.mxu0 0
    %522 = vmatpush2.bf16.msra.mxu0 0
    %523 = vmatprep.subr.bf16.mxu0 0
    %524 = vmatpush2.bf16.msra.mxu0 0
    %525 = vmatprep.subr.bf16.mxu0 0
    %526 = vmatpush2.bf16.msra.mxu0 0
    %527 = vmatprep.subr.bf16.mxu0 0
    %528 = vmatpush2.bf16.msra.mxu0 0
    %529 = vmatprep.subr.bf16.mxu0 0
    %530 = vmatpush2.bf16.msra.mxu0 0
    %531 = vmatprep.subr.bf16.mxu0 0
    %532 = vmatpush2.bf16.msra.mxu0 0
    %533 = vmatprep.subr.bf16.mxu0 0
    %534 = vmatpush2.bf16.msra.mxu0 0
    %535 = vmatprep.mubr.bf16.mxu0 0
    %536 = vmatmul.mubr.bf16.gmra.mxu0 %v276
    %v537 = vpop.f32.mrf.mxu0
    %v538 = vadd.f32 %v498, %v537
    %v539 = vpop.f32.mrf.mxu0
    %v540 = vpop.f32.mrf.mxu0
    %v541 = vadd.f32 %v498, %v540
    %v542 = vpop.f32.mrf.mxu0
    %543 = vmatprep.mubr.bf16.mxu0 0
    %544 = vmatmul.mubr.bf16.gmra.mxu0 %v279
    %v545 = vpop.f32.mrf.mxu0
    %v546 = vadd.f32 %v498, %v545
    %v547 = vpop.f32.mrf.mxu0
    %v548 = vpop.f32.mrf.mxu0
    %v549 = vadd.f32 %v498, %v548
    %v550 = vpop.f32.mrf.mxu0
    %551 = vmatprep.mubr.bf16.mxu0 0
    %552 = vmatmul.mubr.bf16.gmra.mxu0 %v282
    %v553 = vpop.f32.mrf.mxu0
    %v554 = vadd.f32 %v498, %v553
    %v555 = vpop.f32.mrf.mxu0
    %v556 = vpop.f32.mrf.mxu0
    %v557 = vadd.f32 %v498, %v556
    %v558 = vpop.f32.mrf.mxu0
    %559 = vmatprep.mubr.bf16.mxu0 0
    %560 = vmatmul.mubr.bf16.gmra.mxu0 %v285
    %v561 = vpop.f32.mrf.mxu0
    %v562 = vadd.f32 %v498, %v561
    %v563 = vpop.f32.mrf.mxu0
    %v564 = vpop.f32.mrf.mxu0
    %v565 = vpop.f32.mrf.mxu0
    %566 = vdwg.mxu0
    %vm567 = vcmp.gt.f32.partialorder %v538, 0.0
    %vm568 = vcmp.gt.f32.partialorder %v541, 0.0
    %vm569 = vcmp.gt.f32.partialorder %v546, 0.0
    %vm570 = vcmp.gt.f32.partialorder %v549, 0.0
    %vm571 = vcmp.gt.f32.partialorder %v554, 0.0
    %vm572 = vcmp.gt.f32.partialorder %v557, 0.0
    %vm573 = vcmp.gt.f32.partialorder %v562, 0.0
    %v574 = vmin.f32 %v538, 0.0
    %v575 = vmin.f32 %v541, 0.0
    %v576 = vmin.f32 %v546, 0.0
    %v577 = vmin.f32 %v549, 0.0
    %v578 = vmin.f32 %v554, 0.0
    %v579 = vmin.f32 %v557, 0.0
    %v580 = vmin.f32 %v562, 0.0
    %v581 = vmul.f32 %v574, 1.442695
    %v582 = vpow.pop %v581
    %v583 = vmul.f32 %v575, 1.442695
    %v584 = vpow.pop %v583
    %v585 = vmul.f32 %v576, 1.442695
    %v586 = vpow.pop %v585
    %v587 = vmul.f32 %v577, 1.442695
    %v588 = vpow.pop %v587
    %v589 = vmul.f32 %v578, 1.442695
    %v590 = vpow.pop %v589
    %v591 = vmul.f32 %v579, 1.442695
    %v592 = vpow.pop %v591
    %v593 = vmul.f32 %v580, 1.442695
    %v594 = vpow.pop %v593
    %v595 = vsub.f32 %v582, 1.0
    %v596 = vsub.f32 %v584, 1.0
    %v597 = vsub.f32 %v586, 1.0
    %v598 = vsub.f32 %v588, 1.0
    %v599 = vsub.f32 %v590, 1.0
    %v600 = vsub.f32 %v592, 1.0
    %v601 = vsub.f32 %v594, 1.0
    %v602 = vsel %vm567, %v538, %v595
    %v603 = vsel %vm568, %v541, %v596
    %v604 = vsel %vm569, %v546, %v597
    %v605 = vsel %vm570, %v549, %v598
    %v606 = vsel %vm571, %v554, %v599
    %v607 = vsel %vm572, %v557, %v600
    %v608 = vsel %vm573, %v562, %v601
    %v609 = vpack.c.bf16 %v603, %v602
    %v610 = vpack.c.bf16 %v605, %v604
    %v611 = vpack.c.bf16 %v607, %v606
    %v612 = vpack.c.bf16 %v608, %v608
    %v613 = vld [vmem:[%s6] sm:$0xff]
    %v614 = vld [vmem:[%s6 + $0x8] sm:$0xff]
    %v615 = vpack.c.bf16 %v614, %v613
    %v617 = vsel %vm183, %v615, 0
    %v620 = vsel %vm196, %v612, 0
    %622 = vmatprep.subr.bf16.mxu0 0
    %623 = vmatpush1.bf16.msra.mxu0 0
    %624 = vmatprep.subr.bf16.mxu0 0
    %625 = vmatpush1.bf16.msra.mxu0 0
    %626 = vmatprep.subr.bf16.mxu0 0
    %627 = vmatpush1.bf16.msra.mxu0 0
    %628 = vmatprep.subr.bf16.mxu0 0
    %629 = vmatpush1.bf16.msra.mxu0 0
    %630 = vmatprep.subr.bf16.mxu0 0
    %631 = vmatpush1.bf16.msra.mxu0 %v620
    %632 = vmatprep.subr.bf16.mxu0 0
    %633 = vmatpush1.bf16.msra.mxu0 %v611
    %634 = vmatprep.subr.bf16.mxu0 0
    %635 = vmatpush1.bf16.msra.mxu0 %v610
    %636 = vmatprep.subr.bf16.mxu0 0
    %637 = vmatpush1.bf16.msra.mxu0 %v609
    %638 = vmatprep.subr.bf16.mxu0 0
    %639 = vmatpush2.bf16.msra.mxu0 0
    %640 = vmatprep.subr.bf16.mxu0 0
    %641 = vmatpush2.bf16.msra.mxu0 0
    %642 = vmatprep.subr.bf16.mxu0 0
    %643 = vmatpush2.bf16.msra.mxu0 0
    %644 = vmatprep.subr.bf16.mxu0 0
    %645 = vmatpush2.bf16.msra.mxu0 0
    %646 = vmatprep.subr.bf16.mxu0 0
    %647 = vmatpush2.bf16.msra.mxu0 0
    %648 = vmatprep.subr.bf16.mxu0 0
    %649 = vmatpush2.bf16.msra.mxu0 0
    %650 = vmatprep.subr.bf16.mxu0 0
    %651 = vmatpush2.bf16.msra.mxu0 0
    %652 = vmatprep.subr.bf16.mxu0 0
    %653 = vmatpush2.bf16.msra.mxu0 0
    %654 = vmatprep.mubr.bf16.mxu0 0
    %655 = vmatmul.mubr.bf16.gmra.mxu0 %v617
    %v656 = vpop.f32.mrf.mxu0
    %v657 = vadd.f32 0.0, %v656
    %v658 = vpop.f32.mrf.mxu0
    %v659 = vpop.f32.mrf.mxu0
    %v660 = vadd.f32 0.0, %v659
    %v661 = vpop.f32.mrf.mxu0
    %662 = vdwg.mxu0
    %663 = vst.msk [vmem:[#allocation7] sm:$0xff] %vm183, %v657
    %664 = vst.msk [vmem:[#allocation7 + $0x8] sm:$0xff] %vm183, %v660
    %v665 = vld [vmem:[%s7] sm:$0x1]
    %v666 = vpack.c.bf16 %v665, %v665
    %v668 = vsel %vm183, %v666, 0
    %670 = vmatprep.subr.bf16.mxu0 0
    %671 = vmatpush1.bf16.msra.mxu0 0
    %672 = vmatprep.subr.bf16.mxu0 0
    %673 = vmatpush1.bf16.msra.mxu0 0
    %674 = vmatprep.subr.bf16.mxu0 0
    %675 = vmatpush1.bf16.msra.mxu0 0
    %676 = vmatprep.subr.bf16.mxu0 0
    %677 = vmatpush1.bf16.msra.mxu0 0
    %678 = vmatprep.subr.bf16.mxu0 0
    %679 = vmatpush1.bf16.msra.mxu0 %v620
    %680 = vmatprep.subr.bf16.mxu0 0
    %681 = vmatpush1.bf16.msra.mxu0 %v611
    %682 = vmatprep.subr.bf16.mxu0 0
    %683 = vmatpush1.bf16.msra.mxu0 %v610
    %684 = vmatprep.subr.bf16.mxu0 0
    %685 = vmatpush1.bf16.msra.mxu0 %v609
    %686 = vmatprep.subr.bf16.mxu0 0
    %687 = vmatpush2.bf16.msra.mxu0 0
    %688 = vmatprep.subr.bf16.mxu0 0
    %689 = vmatpush2.bf16.msra.mxu0 0
    %690 = vmatprep.subr.bf16.mxu0 0
    %691 = vmatpush2.bf16.msra.mxu0 0
    %692 = vmatprep.subr.bf16.mxu0 0
    %693 = vmatpush2.bf16.msra.mxu0 0
    %694 = vmatprep.subr.bf16.mxu0 0
    %695 = vmatpush2.bf16.msra.mxu0 0
    %696 = vmatprep.subr.bf16.mxu0 0
    %697 = vmatpush2.bf16.msra.mxu0 0
    %698 = vmatprep.subr.bf16.mxu0 0
    %699 = vmatpush2.bf16.msra.mxu0 0
    %700 = vmatprep.subr.bf16.mxu0 0
    %701 = vmatpush2.bf16.msra.mxu0 0
    %702 = vmatprep.mubr.bf16.mxu0 0
    %703 = vmatmul.mubr.bf16.gmra.mxu0 %v668
    %v704 = vpop.f32.mrf.mxu0
    %v705 = vadd.f32 0.0, %v704
    %v706 = vpop.f32.mrf.mxu0
    %v707 = vpop.f32.mrf.mxu0
    %v708 = vpop.f32.mrf.mxu0
    %709 = vdwg.mxu0
    %vm710 = vcmask 417792
    %711 = vst.msk [vmem:[#allocation8] sm:$0x1] %vm710, %v705
    // Predicated region
    $region42: #{tpu_custom_call.1} parent=1 // pred_check
      _
    $region43: #{tpu_custom_call.1} parent=1 // pred_check_branch
      %713 = sbr.rel (0) target = $region45
    $region44: #{tpu_custom_call.1} parent=1 // pred_region
      %s715 = ssub.s32 256, 256
      %716 = vsyncadd [#allocation4], %s715
      %s717 = sshll.u32 [#allocation7], 4
      %s718 = int_to_ptr.vmem [resolvable:$true] %s717
      %723 = dma.vmem_to_hbm [thread:$0]  %s718, 256, %s8, [#allocation4], 128, 128, 8
    $region45: #{tpu_custom_call.1} parent=1 // pred_fallthru
      _
    // Predicated region
    $region46: #{tpu_custom_call.1} parent=1 // pred_check
      _
    $region47: #{tpu_custom_call.1} parent=1 // pred_check_branch
      %725 = sbr.rel (0) target = $region49
    $region48: #{tpu_custom_call.1} parent=1 // pred_region
      %s727 = ssub.s32 16, 16
      %728 = vsyncadd [#allocation9], %s727
      %s730 = sshll.u32 [#allocation8], 4
      %s731 = int_to_ptr.vmem [resolvable:$true] %s730
      %733 = dma.vmem_to_hbm [thread:$0]  %s731, 16, %s9, [#allocation9]
    $region49: #{tpu_custom_call.1} parent=1 // pred_fallthru
      _
    // Predicated region
    $region50: #{tpu_custom_call.1} parent=1 // pred_check
      _
    $region51: #{tpu_custom_call.1} parent=1 // pred_check_branch
      %735 = sbr.rel (0) target = $region53
    $region52: #{tpu_custom_call.1} parent=1 // pred_region
      %736 = dma.done [#allocation4], 256
    $region53: #{tpu_custom_call.1} parent=1 // pred_fallthru
      _
    // Predicated region
    $region54: #{tpu_custom_call.1} parent=1 // pred_check
      _
    $region55: #{tpu_custom_call.1} parent=1 // pred_check_branch
      %738 = sbr.rel (0) target = $region57
    $region56: #{tpu_custom_call.1} parent=1 // pred_region
      %739 = dma.done [#allocation9], 16
    $region57: #{tpu_custom_call.1} parent=1 // pred_fallthru
      _
    %740 = vsyncpa [#allocation3], 1
    %741 = vsyncpa [#allocation6], 1
    %742 = vsyncpa [#allocation4], 1
    %743 = vsyncpa [#allocation9], 1

</llo_original>
